<compile_context>
chip_gen: v7x
topology: tpu7x:2x2x1
jax: 0.10.0
libtpu: 0.0.40
codegen_flags: <defaults>
</compile_context>

<pallas_src>
from typing import NamedTuple

import jax
import jax.numpy as jnp
import numpy as np
from jax import lax
from jax.experimental import pallas as pl
from jax.experimental.pallas import tpu as pltpu


def _round_up(n, m):
    return pl.cdiv(n, m) * m


# ---------------------------------------------------------------------------
# Kernel: one (tile_m, tile_n) output tile, accumulated over the K grid axis.
# ---------------------------------------------------------------------------
def el_kernel(x_ref, w_ref, b_ref, o_ref, acc_ref):
    k = pl.program_id(2)

    @pl.when(k == 0)
    def _():
        acc_ref[...] = jnp.zeros_like(acc_ref)

    # (tile_m, tile_k) @ (tile_k, tile_n) -> f32 accumulate on the MXU.
    acc_ref[...] += lax.dot_general(
        x_ref[...], w_ref[...],
        dimension_numbers=(((1,), (0,)), ((), ())),
        preferred_element_type=jnp.float32)

    @pl.when(k == pl.num_programs(2) - 1)
    def _():
        o_ref[...] = (acc_ref[...] + b_ref[...].astype(jnp.float32)
                      ).astype(o_ref.dtype)


# ---------------------------------------------------------------------------
# One-time parameter fold (compute + pad + transpose once, cache the result).
# ---------------------------------------------------------------------------
class FoldedELParams(NamedTuple):
    w_t: jax.Array        # (k_pad, n_pad) pre-transposed, zero-padded weight
    b_row: jax.Array      # (1, n_pad) f32 folded bias
    in_features: int
    len_scope: int
    tile_n: int
    tile_k: int


def fold_el_params(w, b, scope_embedding, *, weight_dtype=jnp.float32,
                   tile_n=512, tile_k=512):
    """(X @ W^T + b) @ S^T  ==  X @ (S @ W)^T + (S @ b).

    Computed once in f32 at HIGHEST precision; padded and pre-transposed so
    no per-call weight traffic beyond the kernel's own streaming.
    """
    s32 = scope_embedding.astype(jnp.float32)
    w_eff = jnp.dot(s32, w.astype(jnp.float32),
                    precision=lax.Precision.HIGHEST)          # (L, in)
    b_eff = jnp.dot(s32, b.astype(jnp.float32),
                    precision=lax.Precision.HIGHEST)          # (L,)

    len_scope, in_features = w_eff.shape
    k_pad = _round_up(in_features, 128)
    n_pad = _round_up(len_scope, 128)
    tile_n = min(tile_n, n_pad)
    tile_k = min(tile_k, k_pad)
    n_pad = _round_up(n_pad, tile_n)
    k_pad = _round_up(k_pad, tile_k)

    # Pre-transposed (K, N) layout: MXU-canonical RHS, lane-dense along N.
    w_t = jnp.pad(w_eff.T, ((0, k_pad - in_features),
                            (0, n_pad - len_scope))).astype(weight_dtype)
    b_row = jnp.pad(b_eff.reshape(1, -1),
                    ((0, 0), (0, n_pad - len_scope))).astype(jnp.float32)

    return FoldedELParams(w_t=w_t, b_row=b_row,
                          in_features=in_features, len_scope=len_scope,
                          tile_n=tile_n, tile_k=tile_k)


# ---------------------------------------------------------------------------
# Forward pass using the cached folded params.
# ---------------------------------------------------------------------------
def el_model_forward_folded(x, folded: FoldedELParams):
    """x: (B, in_features) -> (B, len_scope)."""
    batch, in_features = x.shape
    assert in_features == folded.in_features
    k_pad, n_pad = folded.w_t.shape
    tile_n, tile_k = folded.tile_n, folded.tile_k

    # Sublane-align M; 256-row LHS tiles only once batch is large enough to
    # fill a v6e/v7x 256x256 MXU pass.
    m_pad = _round_up(batch, 8)
    tile_m = 256 if m_pad >= 256 else min(128, m_pad)
    m_pad = _round_up(m_pad, tile_m)

    # Pad X only when actually misaligned (avoids an extra HBM pass over X).
    pad_m, pad_k = m_pad - batch, k_pad - in_features
    xp = jnp.pad(x, ((0, pad_m), (0, pad_k))) if (pad_m or pad_k) else x

    grid = (n_pad // tile_n, m_pad // tile_m, k_pad // tile_k)

    x_bytes = xp.dtype.itemsize
    w_bytes = folded.w_t.dtype.itemsize
    out_dtype = x.dtype
    o_bytes = jnp.dtype(out_dtype).itemsize

    # Double-buffered working set -> explicit VMEM budget (v5e 16 MiB scoped
    # default, v7x 64 MiB physical both respected).
    vmem_need = (2 * tile_m * tile_k * x_bytes        # X tiles
                 + 2 * tile_k * tile_n * w_bytes      # W tiles
                 + 2 * tile_n * 4                     # bias tiles
                 + 2 * tile_m * tile_n * o_bytes      # output tiles
                 + tile_m * tile_n * 4)               # f32 accumulator
    vmem_limit = int(min(64 * 2**20, max(2 * vmem_need, 16 * 2**20)))

    cost = pl.CostEstimate(
        flops=2 * m_pad * k_pad * n_pad,
        transcendentals=0,
        bytes_accessed=(m_pad * k_pad * x_bytes
                        + k_pad * n_pad * w_bytes
                        + n_pad * 4
                        + m_pad * n_pad * o_bytes))

    # Grid = (N, M, K): W_eff streamed once per N tile (resident across the
    # inner M steps when K fits a single tile); K innermost is the reduction.
    # N and M are both "parallel" so v7x's two TensorCores / megacore can
    # shard them when the problem spans >=2 tiles.
    zp = pl.pallas_call(
        el_kernel,
        out_shape=jax.ShapeDtypeStruct((m_pad, n_pad), out_dtype),
        grid=grid,
        in_specs=[
            pl.BlockSpec((tile_m, tile_k), lambda n, m, k: (m, k)),   # X
            pl.BlockSpec((tile_k, tile_n), lambda n, m, k: (k, n)),   # W_eff^T
            pl.BlockSpec((1, tile_n), lambda n, m, k: (0, n)),        # bias
        ],
        out_specs=pl.BlockSpec((tile_m, tile_n), lambda n, m, k: (m, n)),
        scratch_shapes=[pltpu.VMEM((tile_m, tile_n), jnp.float32)],
        compiler_params=pltpu.CompilerParams(
            dimension_semantics=("parallel", "parallel", "arbitrary"),
            vmem_limit_bytes=vmem_limit),
        cost_estimate=cost,
    )(xp, folded.w_t, folded.b_row)

    return zp[:batch, :folded.len_scope]


def el_model_forward(x, w, b, scope_embedding):
    """Original-signature convenience wrapper (fold is one-time in real use).
    x: (B, in), w: (out, in), b: (out,), scope_embedding: (L, out) -> (B, L)."""
    folded = fold_el_params(w, b, scope_embedding)
    return el_model_forward_folded(x, folded)


if __name__ == "__main__":
    batch = 8
    in_features = 32
    out_features = 64
    len_scope = 16

    key = jax.random.PRNGKey(0)
    k_x, k_w, k_b, k_s = jax.random.split(key, 4)

    x = jax.random.normal(k_x, (batch, in_features), dtype=jnp.float32)
    # Deterministic "nn.Linear"-like params (synthetic, not a checkpoint).
    w = jax.random.normal(k_w, (out_features, in_features), dtype=jnp.float32) * 0.1
    b = jax.random.normal(k_b, (out_features,), dtype=jnp.float32) * 0.1
    scope_embedding = jax.random.normal(
        k_s, (len_scope, out_features), dtype=jnp.float32)

    # One-time fold (padding + transpose included), then the Pallas call.
    folded = fold_el_params(w, b, scope_embedding)
    z = el_model_forward_folded(x, folded)
    z = jax.block_until_ready(z)

    # Pure-JAX reference in the original two-matmul order.
    ref = (jnp.dot(x, w.T, precision=lax.Precision.HIGHEST) + b)
    ref = jnp.dot(ref, scope_embedding.T, precision=lax.Precision.HIGHEST)
    np.testing.assert_allclose(np.asarray(z), np.asarray(ref),
                               rtol=1e-4, atol=1e-4)

    print("KERNEL_OK")
</pallas_src>

<mosaic_0001>
module attributes {stable_mosaic.version = 11 : i64} {
  func.func @el_kernel(%arg0: i32, %arg1: i32, %arg2: i32, %arg3: memref<8x128xf32, #tpu.memory_space<vmem>>, %arg4: memref<128x128xf32, #tpu.memory_space<vmem>>, %arg5: memref<1x128xf32, #tpu.memory_space<vmem>>, %arg6: memref<8x128xf32, #tpu.memory_space<vmem>>, %arg7: memref<8x128xf32, #tpu.memory_space<vmem>>) attributes {dimension_semantics = [#tpu.dimension_semantics<parallel>, #tpu.dimension_semantics<parallel>, #tpu.dimension_semantics<arbitrary>], iteration_bounds = array<i64: 1, 1, 1>, scalar_prefetch = 0 : i64, scratch_operands = 1 : i64, tpu.core_type = #tpu.core_type<tc>, window_params = [{transform_indices = @transform_0, window_bounds = array<i64: 8, 128>}, {transform_indices = @transform_1, window_bounds = array<i64: 128, 128>}, {transform_indices = @transform_2, window_bounds = array<i64: 1, 128>}, {transform_indices = @transform_3, window_bounds = array<i64: 8, 128>}]} {
    %c0_i32 = arith.constant 0 : i32
    %0 = arith.cmpi eq, %arg2, %c0_i32 : i32
    %1 = arith.extui %0 : i1 to i32
    %c0_i32_0 = arith.constant 0 : i32
    %2 = arith.cmpi ne, %1, %c0_i32_0 : i32
    scf.if %2 {
      %cst_10 = arith.constant 0.000000e+00 : f32
      %12 = vector.broadcast %cst_10 : f32 to vector<8x128xf32>
      %c0_11 = arith.constant 0 : index
      %c0_12 = arith.constant 0 : index
      %13 = vector.load %arg7[%c0_11, %c0_12] : memref<8x128xf32, #tpu.memory_space<vmem>>, vector<8x128xf32>
      tpu.vector_store %arg7[%c0_11, %c0_12], %12 {strides = array<i32>} : memref<8x128xf32, #tpu.memory_space<vmem>>, vector<8x128xf32>,
    } else {
    }
    %c0 = arith.constant 0 : index
    %c0_1 = arith.constant 0 : index
    %3 = vector.load %arg7[%c0, %c0_1] : memref<8x128xf32, #tpu.memory_space<vmem>>, vector<8x128xf32>
    %c0_2 = arith.constant 0 : index
    %c0_3 = arith.constant 0 : index
    %4 = vector.load %arg3[%c0_2, %c0_3] : memref<8x128xf32, #tpu.memory_space<vmem>>, vector<8x128xf32>
    %c0_4 = arith.constant 0 : index
    %c0_5 = arith.constant 0 : index
    %5 = vector.load %arg4[%c0_4, %c0_5] : memref<128x128xf32, #tpu.memory_space<vmem>>, vector<128x128xf32>
    %cst = arith.constant dense<0.000000e+00> : vector<8x128xf32>
    %6 = tpu.matmul %4, %5, %cst {dimension_numbers = #tpu.dot_dimension_numbers<[1], [0], [0], [1], [0, 0, 1, 1], [], []>} : vector<8x128xf32>, vector<128x128xf32>, vector<8x128xf32> -> vector<8x128xf32>
    %7 = arith.addf %3, %6 : vector<8x128xf32>
    %c0_6 = arith.constant 0 : index
    %c0_7 = arith.constant 0 : index
    %8 = vector.load %arg7[%c0_6, %c0_7] : memref<8x128xf32, #tpu.memory_space<vmem>>, vector<8x128xf32>
    tpu.vector_store %arg7[%c0_6, %c0_7], %7 {strides = array<i32>} : memref<8x128xf32, #tpu.memory_space<vmem>>, vector<8x128xf32>,
    %c0_i32_8 = arith.constant 0 : i32
    %9 = arith.cmpi eq, %arg2, %c0_i32_8 : i32
    %10 = arith.extui %9 : i1 to i32
    %c0_i32_9 = arith.constant 0 : i32
    %11 = arith.cmpi ne, %10, %c0_i32_9 : i32
    scf.if %11 {
      %c0_10 = arith.constant 0 : index
      %c0_11 = arith.constant 0 : index
      %12 = vector.load %arg7[%c0_10, %c0_11] : memref<8x128xf32, #tpu.memory_space<vmem>>, vector<8x128xf32>
      %c0_12 = arith.constant 0 : index
      %c0_13 = arith.constant 0 : index
      %13 = vector.load %arg5[%c0_12, %c0_13] : memref<1x128xf32, #tpu.memory_space<vmem>>, vector<1x128xf32>
      %14 = vector.broadcast %13 : vector<1x128xf32> to vector<8x128xf32>
      %15 = arith.addf %12, %14 : vector<8x128xf32>
      %c0_14 = arith.constant 0 : index
      %c0_15 = arith.constant 0 : index
      %16 = vector.load %arg6[%c0_14, %c0_15] : memref<8x128xf32, #tpu.memory_space<vmem>>, vector<8x128xf32>
      tpu.vector_store %arg6[%c0_14, %c0_15], %15 {strides = array<i32>} : memref<8x128xf32, #tpu.memory_space<vmem>>, vector<8x128xf32>,
    } else {
    }
    return
  }
  func.func @transform_0(%arg0: i32, %arg1: i32, %arg2: i32) -> (i32, i32) {
    %c0_i32 = arith.constant 0 : i32
    return %arg1, %arg2 : i32, i32
  }
  func.func @transform_1(%arg0: i32, %arg1: i32, %arg2: i32) -> (i32, i32) {
    %c0_i32 = arith.constant 0 : i32
    return %arg2, %arg0 : i32, i32
  }
  func.func @transform_2(%arg0: i32, %arg1: i32, %arg2: i32) -> (i32, i32) {
    %c0_i32 = arith.constant 0 : i32
    %c0_i32_0 = arith.constant 0 : i32
    return %c0_i32, %arg0 : i32, i32
  }
  func.func @transform_3(%arg0: i32, %arg1: i32, %arg2: i32) -> (i32, i32) {
    %c0_i32 = arith.constant 0 : i32
    return %arg1, %arg0 : i32, i32
  }
}

</mosaic_0001>

<llo_original>
// kernel: tpu_custom_call.1
$region0: #{tpu_custom_call.1}
  #allocation0 [shape = 'u32[]', space=smem, size = 0x4, offset = 0x4, fixed_abs, tag = 'smem constant byte address 0x4 - core index']
  #allocation1 [shape = 'u32[144,128]{1,0:T(1,128)}', space=vmem, size = 0x12000, scoped, tag = 'internal scratch']
  #allocation2 [shape = 'f32[8,128]{1,0:T(8,128)}', space=vmem, size = 0x1000, scoped, tag = 'scratch operand']
  %s0 = inlined_call_operand.hbm [shape: f32[8,128], index: 0, kind: input, shape index: {}]
  %s1 = inlined_call_operand.hbm [shape: f32[128,128], index: 1, kind: input, shape index: {}]
  %s2 = inlined_call_operand.vmem [shape: f32[1,128], index: 2, kind: input, shape index: {}]
  %s3 = inlined_call_operand.hbm [shape: f32[8,128], index: 3, kind: output, shape index: {}]
  %s4 = sld [smem:[#allocation0]]
  $region38: #{tpu_custom_call.1} parent=0
    _
  %s6 = ssub.s32 1, %s4
  %s7 = scalar_select 0, %s6, %s4
  $region1: #{tpu_custom_call.1} parent=0
    #allocation3 [shape = 'u8[4096]{0}', space=vmem, size = 0x1000, scoped, tag = 'input window, operand 0, single buffered']
    #allocation4 [shape = 's32[1]{0}', space=sflag, size = 0x4, scoped, tag = 'scoped memory for tpu_custom_call.1']
    #allocation5 [shape = 's32[1]{0}', space=sflag, size = 0x4, scoped, tag = 'scoped memory for tpu_custom_call.1']
    #allocation6 [shape = 'u8[65536]{0}', space=vmem, size = 0x10000, scoped, tag = 'input window, operand 1, single buffered']
    #allocation7 [shape = 's32[1]{0}', space=sflag, size = 0x4, scoped, tag = 'scoped memory for tpu_custom_call.1']
    #allocation8 [shape = 'u8[4096]{0}', space=vmem, size = 0x1000, scoped, tag = 'output window, operand 0, single buffered']
    %8 = vsyncpa [#allocation4], 0
    %9 = vsyncpa [#allocation7], 0
    %10 = vsyncpa [#allocation5], 0
    // Predicated region
    $region2: #{tpu_custom_call.1} parent=1 // pred_check
      _
    $region3: #{tpu_custom_call.1} parent=1 // pred_check_branch
      %12 = sbr.rel (0) target = $region5
    $region4: #{tpu_custom_call.1} parent=1 // pred_region
      %s14 = ssub.s32 128, 128
      %15 = vsyncadd [#allocation4], %s14
      %s17 = sshll.u32 [#allocation3], 4
      %s18 = int_to_ptr.vmem [resolvable:$true] %s17
      %20 = dma.hbm_to_vmem [thread:$0]  %s0, 128, %s18, [#allocation4]
    $region5: #{tpu_custom_call.1} parent=1 // pred_fallthru
      _
    // Predicated region
    $region6: #{tpu_custom_call.1} parent=1 // pred_check
      _
    $region7: #{tpu_custom_call.1} parent=1 // pred_check_branch
      %22 = sbr.rel (0) target = $region9
    $region8: #{tpu_custom_call.1} parent=1 // pred_region
      %s24 = ssub.s32 2048, 2048
      %25 = vsyncadd [#allocation7], %s24
      %s26 = sshll.u32 [#allocation6], 4
      %s27 = int_to_ptr.vmem [resolvable:$true] %s26
      %32 = dma.hbm_to_vmem [thread:$0]  %s1, 2048, %s27, [#allocation7], 128, 128, 8
    $region9: #{tpu_custom_call.1} parent=1 // pred_fallthru
      _
    // Predicated region
    $region10: #{tpu_custom_call.1} parent=1 // pred_check
      _
    $region11: #{tpu_custom_call.1} parent=1 // pred_check_branch
      %34 = sbr.rel (0) target = $region13
    $region12: #{tpu_custom_call.1} parent=1 // pred_region
      _
    $region13: #{tpu_custom_call.1} parent=1 // pred_fallthru
      _
    // Predicated region
    $region14: #{tpu_custom_call.1} parent=1 // pred_check
      _
    $region15: #{tpu_custom_call.1} parent=1 // pred_check_branch
      %36 = sbr.rel (0) target = $region17
    $region16: #{tpu_custom_call.1} parent=1 // pred_region
      %37 = dma.done [#allocation4], 128
    $region17: #{tpu_custom_call.1} parent=1 // pred_fallthru
      _
    // Predicated region
    $region18: #{tpu_custom_call.1} parent=1 // pred_check
      _
    $region19: #{tpu_custom_call.1} parent=1 // pred_check_branch
      %39 = sbr.rel (0) target = $region21
    $region20: #{tpu_custom_call.1} parent=1 // pred_region
      %40 = dma.done [#allocation7], 2048
    $region21: #{tpu_custom_call.1} parent=1 // pred_fallthru
      _
    %p41 = scmp.eq.s32.totalorder 0, 0
    // Predicated region
    $region22: #{tpu_custom_call.1} parent=1 // pred_check
      %p42 = pneg %p41
    $region23: #{tpu_custom_call.1} parent=1 // pred_check_branch
      %44 = sbr.rel (%p42) target = $region25
    $region24: #{tpu_custom_call.1} parent=1 // pred_region
      %45 = vst [vmem:[#allocation2] sm:$0xff] 0.0
    $region25: #{tpu_custom_call.1} parent=1 // pred_fallthru
      _
    %v46 = vld [vmem:[#allocation2] sm:$0xff]
    %v47 = vld [vmem:[#allocation3] sm:$0xff]
    %v48 = vld [vmem:[#allocation6] sm:$0xff]
    %v49 = vld [vmem:[#allocation6 + $0x8] sm:$0xff]
    %v50 = vld [vmem:[#allocation6 + $0x10] sm:$0xff]
    %v51 = vld [vmem:[#allocation6 + $0x18] sm:$0xff]
    %v52 = vld [vmem:[#allocation6 + $0x20] sm:$0xff]
    %v53 = vld [vmem:[#allocation6 + $0x28] sm:$0xff]
    %v54 = vld [vmem:[#allocation6 + $0x30] sm:$0xff]
    %v55 = vld [vmem:[#allocation6 + $0x38] sm:$0xff]
    %v56 = vld [vmem:[#allocation6 + $0x40] sm:$0xff]
    %v57 = vld [vmem:[#allocation6 + $0x48] sm:$0xff]
    %v58 = vld [vmem:[#allocation6 + $0x50] sm:$0xff]
    %v59 = vld [vmem:[#allocation6 + $0x58] sm:$0xff]
    %v60 = vld [vmem:[#allocation6 + $0x60] sm:$0xff]
    %v61 = vld [vmem:[#allocation6 + $0x68] sm:$0xff]
    %v62 = vld [vmem:[#allocation6 + $0x70] sm:$0xff]
    %v63 = vld [vmem:[#allocation6 + $0x78] sm:$0xff]
    %64 = vmatprep.subr.mxu0 0.0
    %65 = vmatpush1.msra.mxu0 %v48
    %66 = vmatprep.subr.mxu0 0.0
    %67 = vmatpush1.msra.mxu0 %v49
    %68 = vmatprep.subr.mxu0 0.0
    %69 = vmatpush1.msra.mxu0 %v50
    %70 = vmatprep.subr.mxu0 0.0
    %71 = vmatpush1.msra.mxu0 %v51
    %72 = vmatprep.subr.mxu0 0.0
    %73 = vmatpush1.msra.mxu0 %v52
    %74 = vmatprep.subr.mxu0 0.0
    %75 = vmatpush1.msra.mxu0 %v53
    %76 = vmatprep.subr.mxu0 0.0
    %77 = vmatpush1.msra.mxu0 %v54
    %78 = vmatprep.subr.mxu0 0.0
    %79 = vmatpush1.msra.mxu0 %v55
    %80 = vmatprep.subr.mxu0 0.0
    %81 = vmatpush1.msra.mxu0 %v56
    %82 = vmatprep.subr.mxu0 0.0
    %83 = vmatpush1.msra.mxu0 %v57
    %84 = vmatprep.subr.mxu0 0.0
    %85 = vmatpush1.msra.mxu0 %v58
    %86 = vmatprep.subr.mxu0 0.0
    %87 = vmatpush1.msra.mxu0 %v59
    %88 = vmatprep.subr.mxu0 0.0
    %89 = vmatpush1.msra.mxu0 %v60
    %90 = vmatprep.subr.mxu0 0.0
    %91 = vmatpush1.msra.mxu0 %v61
    %92 = vmatprep.subr.mxu0 0.0
    %93 = vmatpush1.msra.mxu0 %v62
    %94 = vmatprep.subr.mxu0 0.0
    %95 = vmatpush1.msra.mxu0 %v63
    %96 = vmatprep.subr.mxu0 0.0
    %97 = vmatpush1.msra.mxu0 0.0
    %98 = vmatprep.subr.mxu0 0.0
    %99 = vmatpush1.msra.mxu0 0.0
    %100 = vmatprep.subr.mxu0 0.0
    %101 = vmatpush1.msra.mxu0 0.0
    %102 = vmatprep.subr.mxu0 0.0
    %103 = vmatpush1.msra.mxu0 0.0
    %104 = vmatprep.subr.mxu0 0.0
    %105 = vmatpush1.msra.mxu0 0.0
    %106 = vmatprep.subr.mxu0 0.0
    %107 = vmatpush1.msra.mxu0 0.0
    %108 = vmatprep.subr.mxu0 0.0
    %109 = vmatpush1.msra.mxu0 0.0
    %110 = vmatprep.subr.mxu0 0.0
    %111 = vmatpush1.msra.mxu0 0.0
    %112 = vmatprep.subr.mxu0 0.0
    %113 = vmatpush1.msra.mxu0 0.0
    %114 = vmatprep.subr.mxu0 0.0
    %115 = vmatpush1.msra.mxu0 0.0
    %116 = vmatprep.subr.mxu0 0.0
    %117 = vmatpush1.msra.mxu0 0.0
    %118 = vmatprep.subr.mxu0 0.0
    %119 = vmatpush1.msra.mxu0 0.0
    %120 = vmatprep.subr.mxu0 0.0
    %121 = vmatpush1.msra.mxu0 0.0
    %122 = vmatprep.subr.mxu0 0.0
    %123 = vmatpush1.msra.mxu0 0.0
    %124 = vmatprep.subr.mxu0 0.0
    %125 = vmatpush1.msra.mxu0 0.0
    %126 = vmatprep.subr.mxu0 0.0
    %127 = vmatpush1.msra.mxu0 0.0
    %128 = vmatprep.mubr.f32.mxu0 0.0
    %129 = vmatmul.mubr.f32.gmra.mrb[0].mxu0 %v47
    %v130 = vpop.f32.mrb[0].mxu0
    %v131 = vadd.f32 0.0, %v130
    %v132 = vpop.f32.mrb[0].mxu0
    %133 = vdwg.mxu0
    %v134 = vadd.f32 %v46, %v131
    %135 = vst [vmem:[#allocation2] sm:$0xff] %v134
    // Predicated region
    $region26: #{tpu_custom_call.1} parent=1 // pred_check
      %p136 = pneg %p41
    $region27: #{tpu_custom_call.1} parent=1 // pred_check_branch
      %138 = sbr.rel (%p136) target = $region29
    $region28: #{tpu_custom_call.1} parent=1 // pred_region
      %v139 = vld [vmem:[#allocation2] sm:$0xff]
      %v140 = vld [vmem:[%s2] sm:$0x1]
      %v142 = vlaneseq
      %v143 = vshrl.u32 %v142, 7
      %v144 = vsub.s32 0, %v143
      %v145 = vrot.slane %v140, %v144
      %v147 = vadd.f32 %v139, %v145
      %148 = vst [vmem:[#allocation8] sm:$0xff] %v147
    $region29: #{tpu_custom_call.1} parent=1 // pred_fallthru
      _
    // Predicated region
    $region30: #{tpu_custom_call.1} parent=1 // pred_check
      _
    $region31: #{tpu_custom_call.1} parent=1 // pred_check_branch
      %150 = sbr.rel (0) target = $region33
    $region32: #{tpu_custom_call.1} parent=1 // pred_region
      %s152 = ssub.s32 128, 128
      %153 = vsyncadd [#allocation5], %s152
      %s155 = sshll.u32 [#allocation8], 4
      %s156 = int_to_ptr.vmem [resolvable:$true] %s155
      %158 = dma.vmem_to_hbm [thread:$0]  %s156, 128, %s3, [#allocation5]
    $region33: #{tpu_custom_call.1} parent=1 // pred_fallthru
      _
    // Predicated region
    $region34: #{tpu_custom_call.1} parent=1 // pred_check
      _
    $region35: #{tpu_custom_call.1} parent=1 // pred_check_branch
      %160 = sbr.rel (0) target = $region37
    $region36: #{tpu_custom_call.1} parent=1 // pred_region
      %161 = dma.done [#allocation5], 128
    $region37: #{tpu_custom_call.1} parent=1 // pred_fallthru
      _
    %162 = vsyncpa [#allocation4], 1
    %163 = vsyncpa [#allocation7], 1
    %164 = vsyncpa [#allocation5], 1

</llo_original>
